<compile_context>
chip_gen: v7x
topology: tpu7x:2x2x1
jax: 0.10.0
libtpu: 0.0.40
codegen_flags: <defaults>
</compile_context>

<pallas_src>
import functools

import jax
import jax.numpy as jnp
from jax.experimental import pallas as pl
from jax.experimental.pallas import tpu as pltpu


def _round_up(n, m):
    return -(-n // m) * m


@functools.lru_cache(maxsize=1)
def _vmem_limit_bytes() -> int:
    """Generation-aware scoped-VMEM limit with ~25% headroom."""
    cap = 64 * 1024 * 1024  # safe floor: v7x per-TensorCore physical VMEM
    try:
        cap = int(pltpu.get_tpu_info().vmem_capacity_bytes)
    except Exception:
        pass
    # 48 MiB on v7x (64 MiB physical), 96 MiB on v5e/v6e (128 MiB physical).
    return (cap * 3) // 4


def _pick_batch_tile(n_rows: int, n_cols: int) -> int:
    """Rows of the (packed) x per grid step.

    VMEM accounting is lane-padding-aware: a (tb, n_cols) f32 tile physically
    occupies tb * max(n_cols, 128) lanes and the (tb, k) output tile occupies
    tb * 128 lanes; both are double-buffered by the pipeline.
    """
    lane = 128
    budget = (_vmem_limit_bytes() * 4) // 5  # slack for weight buffers/scratch
    bytes_per_row = 2 * 4 * (max(n_cols, lane) + lane)  # 2x = double buffering
    tb_vmem = max(budget // bytes_per_row, 8)
    # TODO(synk): for very large input_dim (row bytes approaching the VMEM
    # budget) add a K grid axis ("arbitrary") with an accumulator scratch
    # instead of shrinking the batch tile below 8 rows.

    # >= ~2 MiB of real x traffic per step, but keep >= ~8 grid steps on big
    # inputs so the "parallel" axis can be sharded across v7x's two TCs.
    min_rows = _round_up(max(1, (2 * 1024 * 1024) // (n_cols * 4)), 128)
    tb = min(tb_vmem, max(min_rows, -(-n_rows // 8)))

    if tb >= n_rows:
        return n_rows  # single full-extent tile
    if tb >= 128:
        return (tb // 128) * 128
    return max((tb // 8) * 8, 8)


def _linear_kernel(x_ref, w_ref, o_ref):
    # x_ref: (tb, K), w_ref: (K, k), o_ref: (tb, k).
    # x stays as LHS -> no per-step relayout/transpose of the big tile; full-f32
    # MXU precision is free because the kernel is HBM-bound.
    o_ref[...] = jnp.dot(
        x_ref[...],
        w_ref[...],
        preferred_element_type=jnp.float32,
        precision=jax.lax.Precision.HIGHEST,
    ).astype(o_ref.dtype)


@functools.partial(jax.jit, static_argnames=("k", "tb"))
def _pallas_forward(x, weight, bias, *, k: int, tb: int):
    B, D = x.shape
    K = k * D
    n_rows = B // k

    # Free, contiguous repack: row i of x_packed = rows [i*k, (i+1)*k) of x.
    x_packed = x.reshape(n_rows, K)

    if k > 1:
        # Block-diagonal (K, k) weight: column j holds w in rows j*D .. j*D+D-1,
        # so (x_packed @ w_rhs)[i, j] == x[i*k + j] . w .
        w = weight.reshape(D)
        eye = jnp.eye(k, dtype=w.dtype)
        w_rhs = (eye[:, None, :] * w[None, :, None]).reshape(K, k)
    else:
        w_rhs = weight.reshape(D, 1)  # == weight.T

    num_tiles = pl.cdiv(n_rows, tb)  # ragged last block handled by Pallas

    y = pl.pallas_call(
        _linear_kernel,
        out_shape=jax.ShapeDtypeStruct((n_rows, k), jnp.float32),
        grid_spec=pltpu.PrefetchScalarGridSpec(
            num_scalar_prefetch=0,
            grid=(num_tiles,),
            in_specs=[
                # x: streamed batch tiles (double-buffered pipeline).
                pl.BlockSpec((tb, K), lambda i: (i, 0)),
                # weight: same block every step -> VMEM-resident.
                pl.BlockSpec((K, k), lambda i: (0, 0)),
            ],
            out_specs=pl.BlockSpec((tb, k), lambda i: (i, 0)),
        ),
        compiler_params=pltpu.CompilerParams(
            dimension_semantics=("parallel",),
            vmem_limit_bytes=_vmem_limit_bytes(),
        ),
    )(x_packed, w_rhs)

    # Layout plumbing + bias add outside the kernel (fused by XLA).
    return y.reshape(B, 1) + bias.reshape(1, 1)


_XLA_FALLBACK_BYTES = 1 << 20  # below ~1 MiB of x, pallas_call launch dominates


def linear_regression_forward(x, weight, bias, *, tb=None, force_pallas=False):
    """nn.Linear(input_dim, 1) forward: x @ weight.T + bias.

    x: (B, D) f32, weight: (1, D) f32, bias: (1,) f32 -> (B, 1) f32.
    `tb` (optional) = rows of the *packed* x per grid step.
    """
    B, D = x.shape

    if not force_pallas and B * D * x.dtype.itemsize < _XLA_FALLBACK_BYTES:
        # Tiny problem: XLA's fused GEMV beats the fixed pallas_call cost.
        return x @ weight.T + bias.reshape(1, 1)

    # Lane-repacking factor: for D < 128 fold k rows of x into one >=128-lane row.
    k = 1
    if D < 128:
        k_try = max(1, 128 // D)
        if B % k_try == 0:
            k = k_try

    n_rows = B // k
    if tb is None:
        tb = _pick_batch_tile(n_rows, k * D)
    else:
        tb = int(tb)
        if tb < n_rows:
            tb = max(8, (tb // 8) * 8)  # sublane-aligned partial tiles
    tb = min(int(tb), n_rows)

    return _pallas_forward(x, weight, bias, k=k, tb=tb)


if __name__ == "__main__":
    key = jax.random.PRNGKey(0)
    kx, kw, kb, kx2, kx3, kw3 = jax.random.split(key, 6)

    # --- Case 1: tiny batch, D=32 (lane-repacked path, single full-extent tile)
    batch, input_dim = 8, 32
    bound = 1.0 / (input_dim ** 0.5)
    x = jax.random.normal(kx, (batch, input_dim), dtype=jnp.float32)
    weight = jax.random.uniform(
        kw, (1, input_dim), minval=-bound, maxval=bound, dtype=jnp.float32
    )
    bias = jax.random.uniform(
        kb, (1,), minval=-bound, maxval=bound, dtype=jnp.float32
    )

    out = jax.block_until_ready(
        linear_regression_forward(x, weight, bias, force_pallas=True)
    )
    ref = x @ weight.T + bias
    assert out.shape == (batch, 1)
    assert jnp.allclose(out, ref, atol=1e-4, rtol=1e-4)

    # --- Case 2: multi-tile + ragged last block (no pad copy), D=32 ---
    big_batch = 640  # packed rows = 160 -> one full 128-row tile + ragged 32
    x2 = jax.random.normal(kx2, (big_batch, input_dim), dtype=jnp.float32)
    out2 = jax.block_until_ready(
        linear_regression_forward(x2, weight, bias, tb=128, force_pallas=True)
    )
    ref2 = x2 @ weight.T + bias
    assert out2.shape == (big_batch, 1)
    assert jnp.allclose(out2, ref2, atol=1e-4, rtol=1e-4)

    # --- Case 3: D > 128 fallback path (no repacking), ragged batch ---
    batch3, dim3 = 300, 192
    bound3 = 1.0 / (dim3 ** 0.5)
    x3 = jax.random.normal(kx3, (batch3, dim3), dtype=jnp.float32)
    w3 = jax.random.uniform(
        kw3, (1, dim3), minval=-bound3, maxval=bound3, dtype=jnp.float32
    )
    out3 = jax.block_until_ready(
        linear_regression_forward(x3, w3, bias, tb=128, force_pallas=True)
    )
    ref3 = x3 @ w3.T + bias
    assert out3.shape == (batch3, 1)
    assert jnp.allclose(out3, ref3, atol=1e-4, rtol=1e-4)

    print("KERNEL_OK")
</pallas_src>

<mosaic_0001>
module attributes {stable_mosaic.version = 11 : i64} {
  func.func @_linear_kernel(%arg0: i32, %arg1: memref<2x128xf32, #tpu.memory_space<vmem>>, %arg2: memref<128x4xf32, #tpu.memory_space<vmem>>, %arg3: memref<2x4xf32, #tpu.memory_space<vmem>>) attributes {dimension_semantics = [#tpu.dimension_semantics<parallel>], iteration_bounds = array<i64: 1>, scalar_prefetch = 0 : i64, scratch_operands = 0 : i64, tpu.core_type = #tpu.core_type<tc>, window_params = [{transform_indices = @transform_0, window_bounds = array<i64: 2, 128>}, {pipeline_mode = #tpu.pipeline_mode<synchronous>, transform_indices = @transform_1, window_bounds = array<i64: 128, 4>}, {transform_indices = @transform_2, window_bounds = array<i64: 2, 4>}]} {
    %c0 = arith.constant 0 : index
    %c0_0 = arith.constant 0 : index
    %0 = vector.load %arg1[%c0, %c0_0] : memref<2x128xf32, #tpu.memory_space<vmem>>, vector<2x128xf32>
    %c0_1 = arith.constant 0 : index
    %c0_2 = arith.constant 0 : index
    %1 = vector.load %arg2[%c0_1, %c0_2] : memref<128x4xf32, #tpu.memory_space<vmem>>, vector<128x4xf32>
    %cst = arith.constant dense<0.000000e+00> : vector<2x4xf32>
    %2 = tpu.matmul %0, %1, %cst {dimension_numbers = #tpu.dot_dimension_numbers<[1], [0], [0], [1], [0, 0, 1, 1], [], []>, precision = #tpu.contract_precision<fp32>} : vector<2x128xf32>, vector<128x4xf32>, vector<2x4xf32> -> vector<2x4xf32>
    %c0_3 = arith.constant 0 : index
    %c0_4 = arith.constant 0 : index
    %3 = vector.load %arg3[%c0_3, %c0_4] : memref<2x4xf32, #tpu.memory_space<vmem>>, vector<2x4xf32>
    tpu.vector_store %arg3[%c0_3, %c0_4], %2 {strides = array<i32>} : memref<2x4xf32, #tpu.memory_space<vmem>>, vector<2x4xf32>,
    return
  }
  func.func @transform_0(%arg0: i32) -> (i32, i32) {
    %c0_i32 = arith.constant 0 : i32
    %c0_i32_0 = arith.constant 0 : i32
    return %arg0, %c0_i32 : i32, i32
  }
  func.func @transform_1(%arg0: i32) -> (i32, i32) {
    %c0_i32 = arith.constant 0 : i32
    %c0_i32_0 = arith.constant 0 : i32
    %c0_i32_1 = arith.constant 0 : i32
    return %c0_i32, %c0_i32_0 : i32, i32
  }
  func.func @transform_2(%arg0: i32) -> (i32, i32) {
    %c0_i32 = arith.constant 0 : i32
    %c0_i32_0 = arith.constant 0 : i32
    return %arg0, %c0_i32 : i32, i32
  }
}

</mosaic_0001>

<llo_original>
// kernel: _pallas_forward.1
$region0: #{_pallas_forward.1}
  #allocation0 [shape = 'u32[]', space=smem, size = 0x4, offset = 0x4, fixed_abs, tag = 'smem constant byte address 0x4 - core index']
  #allocation1 [shape = 'u32[144,128]{1,0:T(1,128)}', space=vmem, size = 0x12000, scoped, tag = 'internal scratch']
  %s0 = inlined_call_operand.vmem [shape: f32[2,128], index: 0, kind: input, shape index: {}]
  %s1 = inlined_call_operand.vmem [shape: f32[128,4], index: 1, kind: input, shape index: {}]
  %s2 = inlined_call_operand.vmem [shape: f32[2,4], index: 2, kind: output, shape index: {}]
  %s3 = sld [smem:[#allocation0]]
  $region18: #{_pallas_forward.1} parent=0
    _
  %s5 = ssub.s32 1, %s3
  %s6 = scalar_select 0, %s5, %s3
  // Predicated region
  $region2: #{_pallas_forward.1} parent=0 // pred_check
    _
  $region3: #{_pallas_forward.1} parent=0 // pred_check_branch
    %8 = sbr.rel (0) target = $region5
  $region4: #{_pallas_forward.1} parent=0 // pred_region
    _
  $region5: #{_pallas_forward.1} parent=0 // pred_fallthru
    _
  // Predicated region
  $region6: #{_pallas_forward.1} parent=0 // pred_check
    _
  $region7: #{_pallas_forward.1} parent=0 // pred_check_branch
    %10 = sbr.rel (0) target = $region9
  $region8: #{_pallas_forward.1} parent=0 // pred_region
    _
  $region9: #{_pallas_forward.1} parent=0 // pred_fallthru
    _
  %v11 = vld [vmem:[%s0] sm:$0x3]
  %v12 = vld [vmem:[%s1] sm:$0xff]
  %v13 = vld [vmem:[%s1 + $0x8] sm:$0xff]
  %v14 = vld [vmem:[%s1 + $0x10] sm:$0xff]
  %v15 = vld [vmem:[%s1 + $0x18] sm:$0xff]
  %v16 = vld [vmem:[%s1 + $0x20] sm:$0xff]
  %v17 = vld [vmem:[%s1 + $0x28] sm:$0xff]
  %v18 = vld [vmem:[%s1 + $0x30] sm:$0xff]
  %v19 = vld [vmem:[%s1 + $0x38] sm:$0xff]
  %v20 = vld [vmem:[%s1 + $0x40] sm:$0xff]
  %v21 = vld [vmem:[%s1 + $0x48] sm:$0xff]
  %v22 = vld [vmem:[%s1 + $0x50] sm:$0xff]
  %v23 = vld [vmem:[%s1 + $0x58] sm:$0xff]
  %v24 = vld [vmem:[%s1 + $0x60] sm:$0xff]
  %v25 = vld [vmem:[%s1 + $0x68] sm:$0xff]
  %v26 = vld [vmem:[%s1 + $0x70] sm:$0xff]
  %v27 = vld [vmem:[%s1 + $0x78] sm:$0xff]
  %28 = vmatprep.subr.mxu0 0.0
  %v29 = vand.u32 %v12, 4294901760
  %30 = vmatpush1.msra.mxu0 %v29
  %31 = vmatprep.subr.mxu0 0.0
  %v32 = vand.u32 %v13, 4294901760
  %33 = vmatpush1.msra.mxu0 %v32
  %34 = vmatprep.subr.mxu0 0.0
  %v35 = vand.u32 %v14, 4294901760
  %36 = vmatpush1.msra.mxu0 %v35
  %37 = vmatprep.subr.mxu0 0.0
  %v38 = vand.u32 %v15, 4294901760
  %39 = vmatpush1.msra.mxu0 %v38
  %40 = vmatprep.subr.mxu0 0.0
  %v41 = vand.u32 %v16, 4294901760
  %42 = vmatpush1.msra.mxu0 %v41
  %43 = vmatprep.subr.mxu0 0.0
  %v44 = vand.u32 %v17, 4294901760
  %45 = vmatpush1.msra.mxu0 %v44
  %46 = vmatprep.subr.mxu0 0.0
  %v47 = vand.u32 %v18, 4294901760
  %48 = vmatpush1.msra.mxu0 %v47
  %49 = vmatprep.subr.mxu0 0.0
  %v50 = vand.u32 %v19, 4294901760
  %51 = vmatpush1.msra.mxu0 %v50
  %52 = vmatprep.subr.mxu0 0.0
  %v53 = vand.u32 %v20, 4294901760
  %54 = vmatpush1.msra.mxu0 %v53
  %55 = vmatprep.subr.mxu0 0.0
  %v56 = vand.u32 %v21, 4294901760
  %57 = vmatpush1.msra.mxu0 %v56
  %58 = vmatprep.subr.mxu0 0.0
  %v59 = vand.u32 %v22, 4294901760
  %60 = vmatpush1.msra.mxu0 %v59
  %61 = vmatprep.subr.mxu0 0.0
  %v62 = vand.u32 %v23, 4294901760
  %63 = vmatpush1.msra.mxu0 %v62
  %64 = vmatprep.subr.mxu0 0.0
  %v65 = vand.u32 %v24, 4294901760
  %66 = vmatpush1.msra.mxu0 %v65
  %67 = vmatprep.subr.mxu0 0.0
  %v68 = vand.u32 %v25, 4294901760
  %69 = vmatpush1.msra.mxu0 %v68
  %70 = vmatprep.subr.mxu0 0.0
  %v71 = vand.u32 %v26, 4294901760
  %72 = vmatpush1.msra.mxu0 %v71
  %73 = vmatprep.subr.mxu0 0.0
  %v74 = vand.u32 %v27, 4294901760
  %75 = vmatpush1.msra.mxu0 %v74
  %76 = vmatprep.subr.mxu0 0.0
  %77 = vmatpush1.msra.mxu0 0.0
  %78 = vmatprep.subr.mxu0 0.0
  %79 = vmatpush1.msra.mxu0 0.0
  %80 = vmatprep.subr.mxu0 0.0
  %81 = vmatpush1.msra.mxu0 0.0
  %82 = vmatprep.subr.mxu0 0.0
  %83 = vmatpush1.msra.mxu0 0.0
  %84 = vmatprep.subr.mxu0 0.0
  %85 = vmatpush1.msra.mxu0 0.0
  %86 = vmatprep.subr.mxu0 0.0
  %87 = vmatpush1.msra.mxu0 0.0
  %88 = vmatprep.subr.mxu0 0.0
  %89 = vmatpush1.msra.mxu0 0.0
  %90 = vmatprep.subr.mxu0 0.0
  %91 = vmatpush1.msra.mxu0 0.0
  %92 = vmatprep.subr.mxu0 0.0
  %93 = vmatpush1.msra.mxu0 0.0
  %94 = vmatprep.subr.mxu0 0.0
  %95 = vmatpush1.msra.mxu0 0.0
  %96 = vmatprep.subr.mxu0 0.0
  %97 = vmatpush1.msra.mxu0 0.0
  %98 = vmatprep.subr.mxu0 0.0
  %99 = vmatpush1.msra.mxu0 0.0
  %100 = vmatprep.subr.mxu0 0.0
  %101 = vmatpush1.msra.mxu0 0.0
  %102 = vmatprep.subr.mxu0 0.0
  %103 = vmatpush1.msra.mxu0 0.0
  %104 = vmatprep.subr.mxu0 0.0
  %105 = vmatpush1.msra.mxu0 0.0
  %106 = vmatprep.subr.mxu0 0.0
  %107 = vmatpush1.msra.mxu0 0.0
  %108 = vmatprep.mubr.f32.mxu0 0.0
  %v109 = vand.u32 %v11, 4294901760
  %v110 = vsub.f32 %v11, %v109
  %v111 = vand.u32 %v110, 4294901760
  %v112 = vsub.f32 %v110, %v111
  %v113 = vand.u32 %v112, 4294901760
  %114 = vmatmul.mubr.f32.gmra.mrb[0].mxu0 %v113
  %v115 = vpop.f32.mrb[0].mxu0
  %v116 = vadd.f32 0.0, %v115
  %v117 = vpop.f32.mrb[0].mxu0
  %118 = vdwg.mxu0
  %119 = vmatprep.subr.mxu0 0.0
  %v120 = vand.u32 %v12, 4294901760
  %v121 = vsub.f32 %v12, %v120
  %v122 = vand.u32 %v121, 4294901760
  %v123 = vsub.f32 %v121, %v122
  %v124 = vand.u32 %v123, 4294901760
  %125 = vmatpush1.msra.mxu0 %v124
  %126 = vmatprep.subr.mxu0 0.0
  %v127 = vand.u32 %v13, 4294901760
  %v128 = vsub.f32 %v13, %v127
  %v129 = vand.u32 %v128, 4294901760
  %v130 = vsub.f32 %v128, %v129
  %v131 = vand.u32 %v130, 4294901760
  %132 = vmatpush1.msra.mxu0 %v131
  %133 = vmatprep.subr.mxu0 0.0
  %v134 = vand.u32 %v14, 4294901760
  %v135 = vsub.f32 %v14, %v134
  %v136 = vand.u32 %v135, 4294901760
  %v137 = vsub.f32 %v135, %v136
  %v138 = vand.u32 %v137, 4294901760
  %139 = vmatpush1.msra.mxu0 %v138
  %140 = vmatprep.subr.mxu0 0.0
  %v141 = vand.u32 %v15, 4294901760
  %v142 = vsub.f32 %v15, %v141
  %v143 = vand.u32 %v142, 4294901760
  %v144 = vsub.f32 %v142, %v143
  %v145 = vand.u32 %v144, 4294901760
  %146 = vmatpush1.msra.mxu0 %v145
  %147 = vmatprep.subr.mxu0 0.0
  %v148 = vand.u32 %v16, 4294901760
  %v149 = vsub.f32 %v16, %v148
  %v150 = vand.u32 %v149, 4294901760
  %v151 = vsub.f32 %v149, %v150
  %v152 = vand.u32 %v151, 4294901760
  %153 = vmatpush1.msra.mxu0 %v152
  %154 = vmatprep.subr.mxu0 0.0
  %v155 = vand.u32 %v17, 4294901760
  %v156 = vsub.f32 %v17, %v155
  %v157 = vand.u32 %v156, 4294901760
  %v158 = vsub.f32 %v156, %v157
  %v159 = vand.u32 %v158, 4294901760
  %160 = vmatpush1.msra.mxu0 %v159
  %161 = vmatprep.subr.mxu0 0.0
  %v162 = vand.u32 %v18, 4294901760
  %v163 = vsub.f32 %v18, %v162
  %v164 = vand.u32 %v163, 4294901760
  %v165 = vsub.f32 %v163, %v164
  %v166 = vand.u32 %v165, 4294901760
  %167 = vmatpush1.msra.mxu0 %v166
  %168 = vmatprep.subr.mxu0 0.0
  %v169 = vand.u32 %v19, 4294901760
  %v170 = vsub.f32 %v19, %v169
  %v171 = vand.u32 %v170, 4294901760
  %v172 = vsub.f32 %v170, %v171
  %v173 = vand.u32 %v172, 4294901760
  %174 = vmatpush1.msra.mxu0 %v173
  %175 = vmatprep.subr.mxu0 0.0
  %v176 = vand.u32 %v20, 4294901760
  %v177 = vsub.f32 %v20, %v176
  %v178 = vand.u32 %v177, 4294901760
  %v179 = vsub.f32 %v177, %v178
  %v180 = vand.u32 %v179, 4294901760
  %181 = vmatpush1.msra.mxu0 %v180
  %182 = vmatprep.subr.mxu0 0.0
  %v183 = vand.u32 %v21, 4294901760
  %v184 = vsub.f32 %v21, %v183
  %v185 = vand.u32 %v184, 4294901760
  %v186 = vsub.f32 %v184, %v185
  %v187 = vand.u32 %v186, 4294901760
  %188 = vmatpush1.msra.mxu0 %v187
  %189 = vmatprep.subr.mxu0 0.0
  %v190 = vand.u32 %v22, 4294901760
  %v191 = vsub.f32 %v22, %v190
  %v192 = vand.u32 %v191, 4294901760
  %v193 = vsub.f32 %v191, %v192
  %v194 = vand.u32 %v193, 4294901760
  %195 = vmatpush1.msra.mxu0 %v194
  %196 = vmatprep.subr.mxu0 0.0
  %v197 = vand.u32 %v23, 4294901760
  %v198 = vsub.f32 %v23, %v197
  %v199 = vand.u32 %v198, 4294901760
  %v200 = vsub.f32 %v198, %v199
  %v201 = vand.u32 %v200, 4294901760
  %202 = vmatpush1.msra.mxu0 %v201
  %203 = vmatprep.subr.mxu0 0.0
  %v204 = vand.u32 %v24, 4294901760
  %v205 = vsub.f32 %v24, %v204
  %v206 = vand.u32 %v205, 4294901760
  %v207 = vsub.f32 %v205, %v206
  %v208 = vand.u32 %v207, 4294901760
  %209 = vmatpush1.msra.mxu0 %v208
  %210 = vmatprep.subr.mxu0 0.0
  %v211 = vand.u32 %v25, 4294901760
  %v212 = vsub.f32 %v25, %v211
  %v213 = vand.u32 %v212, 4294901760
  %v214 = vsub.f32 %v212, %v213
  %v215 = vand.u32 %v214, 4294901760
  %216 = vmatpush1.msra.mxu0 %v215
  %217 = vmatprep.subr.mxu0 0.0
  %v218 = vand.u32 %v26, 4294901760
  %v219 = vsub.f32 %v26, %v218
  %v220 = vand.u32 %v219, 4294901760
  %v221 = vsub.f32 %v219, %v220
  %v222 = vand.u32 %v221, 4294901760
  %223 = vmatpush1.msra.mxu0 %v222
  %224 = vmatprep.subr.mxu0 0.0
  %v225 = vand.u32 %v27, 4294901760
  %v226 = vsub.f32 %v27, %v225
  %v227 = vand.u32 %v226, 4294901760
  %v228 = vsub.f32 %v226, %v227
  %v229 = vand.u32 %v228, 4294901760
  %230 = vmatpush1.msra.mxu0 %v229
  %231 = vmatprep.subr.mxu0 0.0
  %232 = vmatpush1.msra.mxu0 0.0
  %233 = vmatprep.subr.mxu0 0.0
  %234 = vmatpush1.msra.mxu0 0.0
  %235 = vmatprep.subr.mxu0 0.0
  %236 = vmatpush1.msra.mxu0 0.0
  %237 = vmatprep.subr.mxu0 0.0
  %238 = vmatpush1.msra.mxu0 0.0
  %239 = vmatprep.subr.mxu0 0.0
  %240 = vmatpush1.msra.mxu0 0.0
  %241 = vmatprep.subr.mxu0 0.0
  %242 = vmatpush1.msra.mxu0 0.0
  %243 = vmatprep.subr.mxu0 0.0
  %244 = vmatpush1.msra.mxu0 0.0
  %245 = vmatprep.subr.mxu0 0.0
  %246 = vmatpush1.msra.mxu0 0.0
  %247 = vmatprep.subr.mxu0 0.0
  %248 = vmatpush1.msra.mxu0 0.0
  %249 = vmatprep.subr.mxu0 0.0
  %250 = vmatpush1.msra.mxu0 0.0
  %251 = vmatprep.subr.mxu0 0.0
  %252 = vmatpush1.msra.mxu0 0.0
  %253 = vmatprep.subr.mxu0 0.0
  %254 = vmatpush1.msra.mxu0 0.0
  %255 = vmatprep.subr.mxu0 0.0
  %256 = vmatpush1.msra.mxu0 0.0
  %257 = vmatprep.subr.mxu0 0.0
  %258 = vmatpush1.msra.mxu0 0.0
  %259 = vmatprep.subr.mxu0 0.0
  %260 = vmatpush1.msra.mxu0 0.0
  %261 = vmatprep.subr.mxu0 0.0
  %262 = vmatpush1.msra.mxu0 0.0
  %263 = vmatprep.mubr.f32.mxu0 0.0
  %v264 = vand.u32 %v11, 4294901760
  %265 = vmatmul.mubr.f32.gmra.mrb[0].mxu0 %v264
  %v266 = vpop.f32.mrb[0].mxu0
  %v267 = vadd.f32 %v116, %v266
  %v268 = vpop.f32.mrb[0].mxu0
  %269 = vdwg.mxu0
  %270 = vmatprep.subr.mxu0 0.0
  %v271 = vand.u32 %v12, 4294901760
  %v272 = vsub.f32 %v12, %v271
  %273 = vmatpush1.msra.mxu0 %v272
  %274 = vmatprep.subr.mxu0 0.0
  %v275 = vand.u32 %v13, 4294901760
  %v276 = vsub.f32 %v13, %v275
  %277 = vmatpush1.msra.mxu0 %v276
  %278 = vmatprep.subr.mxu0 0.0
  %v279 = vand.u32 %v14, 4294901760
  %v280 = vsub.f32 %v14, %v279
  %281 = vmatpush1.msra.mxu0 %v280
  %282 = vmatprep.subr.mxu0 0.0
  %v283 = vand.u32 %v15, 4294901760
  %v284 = vsub.f32 %v15, %v283
  %285 = vmatpush1.msra.mxu0 %v284
  %286 = vmatprep.subr.mxu0 0.0
  %v287 = vand.u32 %v16, 4294901760
  %v288 = vsub.f32 %v16, %v287
  %289 = vmatpush1.msra.mxu0 %v288
  %290 = vmatprep.subr.mxu0 0.0
  %v291 = vand.u32 %v17, 4294901760
  %v292 = vsub.f32 %v17, %v291
  %293 = vmatpush1.msra.mxu0 %v292
  %294 = vmatprep.subr.mxu0 0.0
  %v295 = vand.u32 %v18, 4294901760
  %v296 = vsub.f32 %v18, %v295
  %297 = vmatpush1.msra.mxu0 %v296
  %298 = vmatprep.subr.mxu0 0.0
  %v299 = vand.u32 %v19, 4294901760
  %v300 = vsub.f32 %v19, %v299
  %301 = vmatpush1.msra.mxu0 %v300
  %302 = vmatprep.subr.mxu0 0.0
  %v303 = vand.u32 %v20, 4294901760
  %v304 = vsub.f32 %v20, %v303
  %305 = vmatpush1.msra.mxu0 %v304
  %306 = vmatprep.subr.mxu0 0.0
  %v307 = vand.u32 %v21, 4294901760
  %v308 = vsub.f32 %v21, %v307
  %309 = vmatpush1.msra.mxu0 %v308
  %310 = vmatprep.subr.mxu0 0.0
  %v311 = vand.u32 %v22, 4294901760
  %v312 = vsub.f32 %v22, %v311
  %313 = vmatpush1.msra.mxu0 %v312
  %314 = vmatprep.subr.mxu0 0.0
  %v315 = vand.u32 %v23, 4294901760
  %v316 = vsub.f32 %v23, %v315
  %317 = vmatpush1.msra.mxu0 %v316
  %318 = vmatprep.subr.mxu0 0.0
  %v319 = vand.u32 %v24, 4294901760
  %v320 = vsub.f32 %v24, %v319
  %321 = vmatpush1.msra.mxu0 %v320
  %322 = vmatprep.subr.mxu0 0.0
  %v323 = vand.u32 %v25, 4294901760
  %v324 = vsub.f32 %v25, %v323
  %325 = vmatpush1.msra.mxu0 %v324
  %326 = vmatprep.subr.mxu0 0.0
  %v327 = vand.u32 %v26, 4294901760
  %v328 = vsub.f32 %v26, %v327
  %329 = vmatpush1.msra.mxu0 %v328
  %330 = vmatprep.subr.mxu0 0.0
  %v331 = vand.u32 %v27, 4294901760
  %v332 = vsub.f32 %v27, %v331
  %333 = vmatpush1.msra.mxu0 %v332
  %334 = vmatprep.subr.mxu0 0.0
  %335 = vmatpush1.msra.mxu0 0.0
  %336 = vmatprep.subr.mxu0 0.0
  %337 = vmatpush1.msra.mxu0 0.0
  %338 = vmatprep.subr.mxu0 0.0
  %339 = vmatpush1.msra.mxu0 0.0
  %340 = vmatprep.subr.mxu0 0.0
  %341 = vmatpush1.msra.mxu0 0.0
  %342 = vmatprep.subr.mxu0 0.0
  %343 = vmatpush1.msra.mxu0 0.0
  %344 = vmatprep.subr.mxu0 0.0
  %345 = vmatpush1.msra.mxu0 0.0
  %346 = vmatprep.subr.mxu0 0.0
  %347 = vmatpush1.msra.mxu0 0.0
  %348 = vmatprep.subr.mxu0 0.0
  %349 = vmatpush1.msra.mxu0 0.0
  %350 = vmatprep.subr.mxu0 0.0
  %351 = vmatpush1.msra.mxu0 0.0
  %352 = vmatprep.subr.mxu0 0.0
  %353 = vmatpush1.msra.mxu0 0.0
  %354 = vmatprep.subr.mxu0 0.0
  %355 = vmatpush1.msra.mxu0 0.0
  %356 = vmatprep.subr.mxu0 0.0
  %357 = vmatpush1.msra.mxu0 0.0
  %358 = vmatprep.subr.mxu0 0.0
  %359 = vmatpush1.msra.mxu0 0.0
  %360 = vmatprep.subr.mxu0 0.0
  %361 = vmatpush1.msra.mxu0 0.0
  %362 = vmatprep.subr.mxu0 0.0
  %363 = vmatpush1.msra.mxu0 0.0
  %364 = vmatprep.subr.mxu0 0.0
  %365 = vmatpush1.msra.mxu0 0.0
  %366 = vmatprep.mubr.f32.mxu0 0.0
  %v367 = vand.u32 %v11, 4294901760
  %v368 = vsub.f32 %v11, %v367
  %369 = vmatmul.mubr.f32.gmra.mrb[0].mxu0 %v368
  %v370 = vpop.f32.mrb[0].mxu0
  %v371 = vadd.f32 %v267, %v370
  %v372 = vpop.f32.mrb[0].mxu0
  %373 = vdwg.mxu0
  %374 = vmatprep.subr.mxu0 0.0
  %v375 = vand.u32 %v12, 4294901760
  %376 = vmatpush1.msra.mxu0 %v375
  %377 = vmatprep.subr.mxu0 0.0
  %v378 = vand.u32 %v13, 4294901760
  %379 = vmatpush1.msra.mxu0 %v378
  %380 = vmatprep.subr.mxu0 0.0
  %v381 = vand.u32 %v14, 4294901760
  %382 = vmatpush1.msra.mxu0 %v381
  %383 = vmatprep.subr.mxu0 0.0
  %v384 = vand.u32 %v15, 4294901760
  %385 = vmatpush1.msra.mxu0 %v384
  %386 = vmatprep.subr.mxu0 0.0
  %v387 = vand.u32 %v16, 4294901760
  %388 = vmatpush1.msra.mxu0 %v387
  %389 = vmatprep.subr.mxu0 0.0
  %v390 = vand.u32 %v17, 4294901760
  %391 = vmatpush1.msra.mxu0 %v390
  %392 = vmatprep.subr.mxu0 0.0
  %v393 = vand.u32 %v18, 4294901760
  %394 = vmatpush1.msra.mxu0 %v393
  %395 = vmatprep.subr.mxu0 0.0
  %v396 = vand.u32 %v19, 4294901760
  %397 = vmatpush1.msra.mxu0 %v396
  %398 = vmatprep.subr.mxu0 0.0
  %v399 = vand.u32 %v20, 4294901760
  %400 = vmatpush1.msra.mxu0 %v399
  %401 = vmatprep.subr.mxu0 0.0
  %v402 = vand.u32 %v21, 4294901760
  %403 = vmatpush1.msra.mxu0 %v402
  %404 = vmatprep.subr.mxu0 0.0
  %v405 = vand.u32 %v22, 4294901760
  %406 = vmatpush1.msra.mxu0 %v405
  %407 = vmatprep.subr.mxu0 0.0
  %v408 = vand.u32 %v23, 4294901760
  %409 = vmatpush1.msra.mxu0 %v408
  %410 = vmatprep.subr.mxu0 0.0
  %v411 = vand.u32 %v24, 4294901760
  %412 = vmatpush1.msra.mxu0 %v411
  %413 = vmatprep.subr.mxu0 0.0
  %v414 = vand.u32 %v25, 4294901760
  %415 = vmatpush1.msra.mxu0 %v414
  %416 = vmatprep.subr.mxu0 0.0
  %v417 = vand.u32 %v26, 4294901760
  %418 = vmatpush1.msra.mxu0 %v417
  %419 = vmatprep.subr.mxu0 0.0
  %v420 = vand.u32 %v27, 4294901760
  %421 = vmatpush1.msra.mxu0 %v420
  %422 = vmatprep.subr.mxu0 0.0
  %423 = vmatpush1.msra.mxu0 0.0
  %424 = vmatprep.subr.mxu0 0.0
  %425 = vmatpush1.msra.mxu0 0.0
  %426 = vmatprep.subr.mxu0 0.0
  %427 = vmatpush1.msra.mxu0 0.0
  %428 = vmatprep.subr.mxu0 0.0
  %429 = vmatpush1.msra.mxu0 0.0
  %430 = vmatprep.subr.mxu0 0.0
  %431 = vmatpush1.msra.mxu0 0.0
  %432 = vmatprep.subr.mxu0 0.0
  %433 = vmatpush1.msra.mxu0 0.0
  %434 = vmatprep.subr.mxu0 0.0
  %435 = vmatpush1.msra.mxu0 0.0
  %436 = vmatprep.subr.mxu0 0.0
  %437 = vmatpush1.msra.mxu0 0.0
  %438 = vmatprep.subr.mxu0 0.0
  %439 = vmatpush1.msra.mxu0 0.0
  %440 = vmatprep.subr.mxu0 0.0
  %441 = vmatpush1.msra.mxu0 0.0
  %442 = vmatprep.subr.mxu0 0.0
  %443 = vmatpush1.msra.mxu0 0.0
  %444 = vmatprep.subr.mxu0 0.0
  %445 = vmatpush1.msra.mxu0 0.0
  %446 = vmatprep.subr.mxu0 0.0
  %447 = vmatpush1.msra.mxu0 0.0
  %448 = vmatprep.subr.mxu0 0.0
  %449 = vmatpush1.msra.mxu0 0.0
  %450 = vmatprep.subr.mxu0 0.0
  %451 = vmatpush1.msra.mxu0 0.0
  %452 = vmatprep.subr.mxu0 0.0
  %453 = vmatpush1.msra.mxu0 0.0
  %454 = vmatprep.mubr.f32.mxu0 0.0
  %v455 = vand.u32 %v11, 4294901760
  %v456 = vsub.f32 %v11, %v455
  %v457 = vand.u32 %v456, 4294901760
  %458 = vmatmul.mubr.f32.gmra.mrb[0].mxu0 %v457
  %v459 = vpop.f32.mrb[0].mxu0
  %v460 = vadd.f32 %v371, %v459
  %v461 = vpop.f32.mrb[0].mxu0
  %462 = vdwg.mxu0
  %463 = vmatprep.subr.mxu0 0.0
  %v464 = vand.u32 %v12, 4294901760
  %v465 = vsub.f32 %v12, %v464
  %v466 = vand.u32 %v465, 4294901760
  %467 = vmatpush1.msra.mxu0 %v466
  %468 = vmatprep.subr.mxu0 0.0
  %v469 = vand.u32 %v13, 4294901760
  %v470 = vsub.f32 %v13, %v469
  %v471 = vand.u32 %v470, 4294901760
  %472 = vmatpush1.msra.mxu0 %v471
  %473 = vmatprep.subr.mxu0 0.0
  %v474 = vand.u32 %v14, 4294901760
  %v475 = vsub.f32 %v14, %v474
  %v476 = vand.u32 %v475, 4294901760
  %477 = vmatpush1.msra.mxu0 %v476
  %478 = vmatprep.subr.mxu0 0.0
  %v479 = vand.u32 %v15, 4294901760
  %v480 = vsub.f32 %v15, %v479
  %v481 = vand.u32 %v480, 4294901760
  %482 = vmatpush1.msra.mxu0 %v481
  %483 = vmatprep.subr.mxu0 0.0
  %v484 = vand.u32 %v16, 4294901760
  %v485 = vsub.f32 %v16, %v484
  %v486 = vand.u32 %v485, 4294901760
  %487 = vmatpush1.msra.mxu0 %v486
  %488 = vmatprep.subr.mxu0 0.0
  %v489 = vand.u32 %v17, 4294901760
  %v490 = vsub.f32 %v17, %v489
  %v491 = vand.u32 %v490, 4294901760
  %492 = vmatpush1.msra.mxu0 %v491
  %493 = vmatprep.subr.mxu0 0.0
  %v494 = vand.u32 %v18, 4294901760
  %v495 = vsub.f32 %v18, %v494
  %v496 = vand.u32 %v495, 4294901760
  %497 = vmatpush1.msra.mxu0 %v496
  %498 = vmatprep.subr.mxu0 0.0
  %v499 = vand.u32 %v19, 4294901760
  %v500 = vsub.f32 %v19, %v499
  %v501 = vand.u32 %v500, 4294901760
  %502 = vmatpush1.msra.mxu0 %v501
  %503 = vmatprep.subr.mxu0 0.0
  %v504 = vand.u32 %v20, 4294901760
  %v505 = vsub.f32 %v20, %v504
  %v506 = vand.u32 %v505, 4294901760
  %507 = vmatpush1.msra.mxu0 %v506
  %508 = vmatprep.subr.mxu0 0.0
  %v509 = vand.u32 %v21, 4294901760
  %v510 = vsub.f32 %v21, %v509
  %v511 = vand.u32 %v510, 4294901760
  %512 = vmatpush1.msra.mxu0 %v511
  %513 = vmatprep.subr.mxu0 0.0
  %v514 = vand.u32 %v22, 4294901760
  %v515 = vsub.f32 %v22, %v514
  %v516 = vand.u32 %v515, 4294901760
  %517 = vmatpush1.msra.mxu0 %v516
  %518 = vmatprep.subr.mxu0 0.0
  %v519 = vand.u32 %v23, 4294901760
  %v520 = vsub.f32 %v23, %v519
  %v521 = vand.u32 %v520, 4294901760
  %522 = vmatpush1.msra.mxu0 %v521
  %523 = vmatprep.subr.mxu0 0.0
  %v524 = vand.u32 %v24, 4294901760
  %v525 = vsub.f32 %v24, %v524
  %v526 = vand.u32 %v525, 4294901760
  %527 = vmatpush1.msra.mxu0 %v526
  %528 = vmatprep.subr.mxu0 0.0
  %v529 = vand.u32 %v25, 4294901760
  %v530 = vsub.f32 %v25, %v529
  %v531 = vand.u32 %v530, 4294901760
  %532 = vmatpush1.msra.mxu0 %v531
  %533 = vmatprep.subr.mxu0 0.0
  %v534 = vand.u32 %v26, 4294901760
  %v535 = vsub.f32 %v26, %v534
  %v536 = vand.u32 %v535, 4294901760
  %537 = vmatpush1.msra.mxu0 %v536
  %538 = vmatprep.subr.mxu0 0.0
  %v539 = vand.u32 %v27, 4294901760
  %v540 = vsub.f32 %v27, %v539
  %v541 = vand.u32 %v540, 4294901760
  %542 = vmatpush1.msra.mxu0 %v541
  %543 = vmatprep.subr.mxu0 0.0
  %544 = vmatpush1.msra.mxu0 0.0
  %545 = vmatprep.subr.mxu0 0.0
  %546 = vmatpush1.msra.mxu0 0.0
  %547 = vmatprep.subr.mxu0 0.0
  %548 = vmatpush1.msra.mxu0 0.0
  %549 = vmatprep.subr.mxu0 0.0
  %550 = vmatpush1.msra.mxu0 0.0
  %551 = vmatprep.subr.mxu0 0.0
  %552 = vmatpush1.msra.mxu0 0.0
  %553 = vmatprep.subr.mxu0 0.0
  %554 = vmatpush1.msra.mxu0 0.0
  %555 = vmatprep.subr.mxu0 0.0
  %556 = vmatpush1.msra.mxu0 0.0
  %557 = vmatprep.subr.mxu0 0.0
  %558 = vmatpush1.msra.mxu0 0.0
  %559 = vmatprep.subr.mxu0 0.0
  %560 = vmatpush1.msra.mxu0 0.0
  %561 = vmatprep.subr.mxu0 0.0
  %562 = vmatpush1.msra.mxu0 0.0
  %563 = vmatprep.subr.mxu0 0.0
  %564 = vmatpush1.msra.mxu0 0.0
  %565 = vmatprep.subr.mxu0 0.0
  %566 = vmatpush1.msra.mxu0 0.0
  %567 = vmatprep.subr.mxu0 0.0
  %568 = vmatpush1.msra.mxu0 0.0
  %569 = vmatprep.subr.mxu0 0.0
  %570 = vmatpush1.msra.mxu0 0.0
  %571 = vmatprep.subr.mxu0 0.0
  %572 = vmatpush1.msra.mxu0 0.0
  %573 = vmatprep.subr.mxu0 0.0
  %574 = vmatpush1.msra.mxu0 0.0
  %575 = vmatprep.mubr.f32.mxu0 0.0
  %v576 = vand.u32 %v11, 4294901760
  %577 = vmatmul.mubr.f32.gmra.mrb[0].mxu0 %v576
  %v578 = vpop.f32.mrb[0].mxu0
  %v579 = vadd.f32 %v460, %v578
  %v580 = vpop.f32.mrb[0].mxu0
  %581 = vdwg.mxu0
  %582 = vmatprep.subr.mxu0 0.0
  %v583 = vand.u32 %v12, 4294901760
  %584 = vmatpush1.msra.mxu0 %v583
  %585 = vmatprep.subr.mxu0 0.0
  %v586 = vand.u32 %v13, 4294901760
  %587 = vmatpush1.msra.mxu0 %v586
  %588 = vmatprep.subr.mxu0 0.0
  %v589 = vand.u32 %v14, 4294901760
  %590 = vmatpush1.msra.mxu0 %v589
  %591 = vmatprep.subr.mxu0 0.0
  %v592 = vand.u32 %v15, 4294901760
  %593 = vmatpush1.msra.mxu0 %v592
  %594 = vmatprep.subr.mxu0 0.0
  %v595 = vand.u32 %v16, 4294901760
  %596 = vmatpush1.msra.mxu0 %v595
  %597 = vmatprep.subr.mxu0 0.0
  %v598 = vand.u32 %v17, 4294901760
  %599 = vmatpush1.msra.mxu0 %v598
  %600 = vmatprep.subr.mxu0 0.0
  %v601 = vand.u32 %v18, 4294901760
  %602 = vmatpush1.msra.mxu0 %v601
  %603 = vmatprep.subr.mxu0 0.0
  %v604 = vand.u32 %v19, 4294901760
  %605 = vmatpush1.msra.mxu0 %v604
  %606 = vmatprep.subr.mxu0 0.0
  %v607 = vand.u32 %v20, 4294901760
  %608 = vmatpush1.msra.mxu0 %v607
  %609 = vmatprep.subr.mxu0 0.0
  %v610 = vand.u32 %v21, 4294901760
  %611 = vmatpush1.msra.mxu0 %v610
  %612 = vmatprep.subr.mxu0 0.0
  %v613 = vand.u32 %v22, 4294901760
  %614 = vmatpush1.msra.mxu0 %v613
  %615 = vmatprep.subr.mxu0 0.0
  %v616 = vand.u32 %v23, 4294901760
  %617 = vmatpush1.msra.mxu0 %v616
  %618 = vmatprep.subr.mxu0 0.0
  %v619 = vand.u32 %v24, 4294901760
  %620 = vmatpush1.msra.mxu0 %v619
  %621 = vmatprep.subr.mxu0 0.0
  %v622 = vand.u32 %v25, 4294901760
  %623 = vmatpush1.msra.mxu0 %v622
  %624 = vmatprep.subr.mxu0 0.0
  %v625 = vand.u32 %v26, 4294901760
  %626 = vmatpush1.msra.mxu0 %v625
  %627 = vmatprep.subr.mxu0 0.0
  %v628 = vand.u32 %v27, 4294901760
  %629 = vmatpush1.msra.mxu0 %v628
  %630 = vmatprep.subr.mxu0 0.0
  %631 = vmatpush1.msra.mxu0 0.0
  %632 = vmatprep.subr.mxu0 0.0
  %633 = vmatpush1.msra.mxu0 0.0
  %634 = vmatprep.subr.mxu0 0.0
  %635 = vmatpush1.msra.mxu0 0.0
  %636 = vmatprep.subr.mxu0 0.0
  %637 = vmatpush1.msra.mxu0 0.0
  %638 = vmatprep.subr.mxu0 0.0
  %639 = vmatpush1.msra.mxu0 0.0
  %640 = vmatprep.subr.mxu0 0.0
  %641 = vmatpush1.msra.mxu0 0.0
  %642 = vmatprep.subr.mxu0 0.0
  %643 = vmatpush1.msra.mxu0 0.0
  %644 = vmatprep.subr.mxu0 0.0
  %645 = vmatpush1.msra.mxu0 0.0
  %646 = vmatprep.subr.mxu0 0.0
  %647 = vmatpush1.msra.mxu0 0.0
  %648 = vmatprep.subr.mxu0 0.0
  %649 = vmatpush1.msra.mxu0 0.0
  %650 = vmatprep.subr.mxu0 0.0
  %651 = vmatpush1.msra.mxu0 0.0
  %652 = vmatprep.subr.mxu0 0.0
  %653 = vmatpush1.msra.mxu0 0.0
  %654 = vmatprep.subr.mxu0 0.0
  %655 = vmatpush1.msra.mxu0 0.0
  %656 = vmatprep.subr.mxu0 0.0
  %657 = vmatpush1.msra.mxu0 0.0
  %658 = vmatprep.subr.mxu0 0.0
  %659 = vmatpush1.msra.mxu0 0.0
  %660 = vmatprep.subr.mxu0 0.0
  %661 = vmatpush1.msra.mxu0 0.0
  %662 = vmatprep.mubr.f32.mxu0 0.0
  %v663 = vand.u32 %v11, 4294901760
  %664 = vmatmul.mubr.f32.gmra.mrb[0].mxu0 %v663
  %v665 = vpop.f32.mrb[0].mxu0
  %v666 = vadd.f32 %v579, %v665
  %v667 = vpop.f32.mrb[0].mxu0
  %668 = vdwg.mxu0
  %vm669 = vcmask 25600
  %670 = vst.msk [vmem:[%s2] sm:$0x3] %vm669, %v666
  // Predicated region
  $region10: #{_pallas_forward.1} parent=0 // pred_check
    _
  $region11: #{_pallas_forward.1} parent=0 // pred_check_branch
    %672 = sbr.rel (0) target = $region13
  $region12: #{_pallas_forward.1} parent=0 // pred_region
    _
  $region13: #{_pallas_forward.1} parent=0 // pred_fallthru
    _
  // Predicated region
  $region14: #{_pallas_forward.1} parent=0 // pred_check
    _
  $region15: #{_pallas_forward.1} parent=0 // pred_check_branch
    %674 = sbr.rel (0) target = $region17
  $region16: #{_pallas_forward.1} parent=0 // pred_region
    _
  $region17: #{_pallas_forward.1} parent=0 // pred_fallthru
    _

</llo_original>
